<compile_context>
chip_gen: v6e
topology: v6e:2x2x1
jax: 0.10.0
libtpu: 0.0.40
codegen_flags: <defaults>
</compile_context>

<pallas_src>
import jax
import jax.numpy as jnp
from jax.experimental import pallas as pl
from jax.experimental.pallas import tpu as pltpu


def _make_seg_loss_kernel(num_classes, n_rows, tile_r, ragged):
    def kernel(w_ref, x_ref, t_ref, out_ref):
        # w_ref : (C,) f32 in SMEM (scalar prefetch)
        # x_ref : (1, C, TILE_R, 128) logits (original dtype)
        # t_ref : (1, TILE_R, 128) int8 labels (ignore / out-of-range -> weight 0)
        # out_ref: (2, 128) f32 partial (num, den) for this grid step
        x = x_ref[0].astype(jnp.float32)                 # (C, TILE_R, 128)
        t = t_ref[0].astype(jnp.int32)                   # (TILE_R, 128)

        # log-softmax over the class (leading) axis: elementwise across dense
        # (TILE_R, 128) tiles -- no cross-lane work.
        m = jnp.max(x, axis=0)                           # (TILE_R, 128)
        e = jnp.exp(x - m[None, :, :])                   # (C, TILE_R, 128)
        lse = jnp.log(jnp.sum(e, axis=0)) + m            # (TILE_R, 128)

        # Unrolled compare/select over the C classes (weights are SMEM scalars).
        # Labels outside [0, C) (including ignore_label) match no class -> weight
        # stays 0, so no separate ignore mask / compare is needed.
        picked = jnp.zeros_like(m)
        wt = jnp.zeros_like(m)
        for c in range(num_classes):
            sel = (t == c)
            picked = jnp.where(sel, x[c], picked)
            wt = jnp.where(sel, w_ref[c], wt)

        contrib = wt * (lse - picked)                    # w_t * (-log p_t); 0 where wt == 0

        if ragged:
            # Ragged final row-tile: kill any garbage (possibly NaN/inf) from the
            # out-of-range rows with a select, not a multiply.
            j = pl.program_id(1)
            row = jax.lax.broadcasted_iota(jnp.int32, (tile_r, 128), 0)
            valid = (row + j * tile_r) < n_rows
            contrib = jnp.where(valid, contrib, 0.0)
            wt = jnp.where(valid, wt, 0.0)

        num = jnp.sum(contrib)                           # sum w_t * (-log p_t)
        den = jnp.sum(wt)                                # sum w_t

        # Lane-dense partial write: num at (0, 0), den at (1, 0), zeros elsewhere.
        r2 = jax.lax.broadcasted_iota(jnp.int32, (2, 128), 0)
        l2 = jax.lax.broadcasted_iota(jnp.int32, (2, 128), 1)
        vals = jnp.where(r2 == 0, num, den)
        out_ref[...] = jnp.where(l2 == 0, vals, jnp.float32(0.0))

    return kernel


def clrnet_seg_loss(preds, targets, class_weights, *,
                    loss_weight=1.0, ignore_label=255, tile_pixels=65536):
    """Weighted NLLLoss(log_softmax(preds, dim=1), targets) * loss_weight.

    preds:   (N, C, H, W), any float dtype -- pass bf16 directly if available
             (the kernel casts to f32 internally); do NOT pre-cast to f32.
    targets: (N, H, W) integer labels; `ignore_label` (and any label outside
             [0, C)) contributes zero weight, matching NLLLoss(ignore_index).
    """
    N, C, H, W = preds.shape
    HW = H * W
    assert not (0 <= ignore_label < C), "ignore_label must lie outside [0, C)"

    # Pixel axis padded to a multiple of 128 only when needed (pad labels are -1
    # -> weight 0, pad logits are 0 -> finite log-softmax, so they contribute 0).
    pad = (-HW) % 128
    x_flat = preds.reshape(N, C, HW)
    t_flat = targets.reshape(N, HW).astype(jnp.int32)
    if pad:
        x_flat = jnp.pad(x_flat, ((0, 0), (0, 0), (0, pad)))
        t_flat = jnp.pad(t_flat, ((0, 0), (0, pad)), constant_values=-1)
    HWp = HW + pad
    R = HWp // 128

    # Dense (sublane, lane) packing of pixels; int8 targets cut target HBM bytes 4x.
    # (ignore_label=255 wraps to -1 in int8 -- still outside [0, C).)
    x = x_flat.reshape(N, C, R, 128)
    t = t_flat.astype(jnp.int8).reshape(N, R, 128)
    w = class_weights.astype(jnp.float32)

    # Row-tile selection: default 64K pixels/step (TILE_R = 512), multiple of 8.
    tile_r = max(1, int(tile_pixels) // 128)
    if tile_r >= R:
        tile_r = R
    else:
        tile_r = max(8, (tile_r // 8) * 8)
    num_tiles = -(-R // tile_r)
    # Keep enough grid steps so both v7x TensorCores get work (neutral on v5e/v6e).
    while N * num_tiles < 4 and tile_r > 8:
        tile_r = max(8, (tile_r // 2 // 8) * 8)
        num_tiles = -(-R // tile_r)
    ragged = (R % tile_r) != 0
    grid = (N, num_tiles)
    G = N * num_tiles

    kernel = _make_seg_loss_kernel(C, R, tile_r, ragged)

    itemsize = jnp.dtype(preds.dtype).itemsize
    cost = pl.CostEstimate(
        flops=N * HWp * (4 * C + 12),
        transcendentals=N * HWp * (C + 1),
        bytes_accessed=N * HWp * (C * itemsize + 1) + G * 2 * 128 * 4,
    )

    partials = pl.pallas_call(
        kernel,
        out_shape=jax.ShapeDtypeStruct((2, G * 128), jnp.float32),
        grid_spec=pltpu.PrefetchScalarGridSpec(
            num_scalar_prefetch=1,                              # class weights -> SMEM
            grid=grid,
            in_specs=[
                pl.BlockSpec((1, C, tile_r, 128), lambda n, j, w_s: (n, 0, j, 0)),  # logits
                pl.BlockSpec((1, tile_r, 128), lambda n, j, w_s: (n, j, 0)),        # targets
            ],
            out_specs=pl.BlockSpec((2, 128), lambda n, j, w_s: (0, n * num_tiles + j)),
        ),
        compiler_params=pltpu.CompilerParams(
            dimension_semantics=("parallel", "parallel")),
        cost_estimate=cost,
    )(w, x, t)

    num_total = jnp.sum(partials[0])
    den_total = jnp.sum(partials[1])
    # NOTE: if every pixel is ignored, den_total == 0 and this returns NaN,
    # matching torch.nn.NLLLoss with weighted mean reduction.
    return (num_total / den_total) * loss_weight


def _reference_loss(preds, targets, class_weights, loss_weight, ignore_label):
    # pure-JAX reference of weighted NLLLoss(log_softmax(preds, dim=1), targets)
    logp = jax.nn.log_softmax(preds.astype(jnp.float32), axis=1)   # (N,C,H,W)
    t = targets.astype(jnp.int32)
    valid = (t != ignore_label)
    safe_t = jnp.where(valid, t, 0)
    picked = jnp.take_along_axis(logp, safe_t[:, None, :, :], axis=1)[:, 0]  # (N,H,W)
    wt = class_weights[safe_t]
    num = jnp.sum(jnp.where(valid, -wt * picked, 0.0))
    den = jnp.sum(jnp.where(valid, wt, 0.0))
    return (num / den) * loss_weight


if __name__ == "__main__":
    # Module config (matches __init__ defaults)
    num_classes = 5
    loss_weight = 1.0
    ignore_label = 255
    bg_weight = 0.5
    class_weights = jnp.ones((num_classes,), jnp.float32).at[0].set(bg_weight)

    # Small deterministic example inputs
    N, C, H, W = 2, num_classes, 16, 16
    key = jax.random.PRNGKey(0)
    k1, k2, k3 = jax.random.split(key, 3)
    preds = jax.random.normal(k1, (N, C, H, W), jnp.float32)
    targets = jax.random.randint(k2, (N, H, W), 0, num_classes, jnp.int32)
    # sprinkle some ignored pixels
    ignore_mask = jax.random.bernoulli(k3, 0.1, (N, H, W))
    targets = jnp.where(ignore_mask, ignore_label, targets)

    loss = clrnet_seg_loss(preds, targets, class_weights,
                           loss_weight=loss_weight, ignore_label=ignore_label)
    loss = jax.block_until_ready(loss)

    ref = _reference_loss(preds, targets, class_weights, loss_weight, ignore_label)
    assert jnp.allclose(loss, ref, rtol=1e-4, atol=1e-5), (loss, ref)
    print("KERNEL_OK")
</pallas_src>

<mosaic_0001>
module attributes {stable_mosaic.version = 11 : i64} {
  func.func @kernel(%arg0: i32, %arg1: i32, %arg2: memref<5xf32, #tpu.memory_space<smem>>, %arg3: memref<1x5x2x128xf32, #tpu.memory_space<vmem>>, %arg4: memref<1x2x128xi8, #tpu.memory_space<vmem>>, %arg5: memref<2x128xf32, #tpu.memory_space<vmem>>) attributes {dimension_semantics = [#tpu.dimension_semantics<parallel>, #tpu.dimension_semantics<parallel>], iteration_bounds = array<i64: 2, 1>, scalar_prefetch = 1 : i64, scratch_operands = 0 : i64, tpu.core_type = #tpu.core_type<tc>, window_params = [{transform_indices = @transform_0, window_bounds = array<i64: 1, 5, 2, 128>}, {transform_indices = @transform_1, window_bounds = array<i64: 1, 2, 128>}, {transform_indices = @transform_2, window_bounds = array<i64: 2, 128>}]} {
    %c0 = arith.constant 0 : index
    %c0_0 = arith.constant 0 : index
    %c0_1 = arith.constant 0 : index
    %c0_2 = arith.constant 0 : index
    %0 = vector.load %arg3[%c0, %c0_0, %c0_1, %c0_2] : memref<1x5x2x128xf32, #tpu.memory_space<vmem>>, vector<1x5x2x128xf32>
    %1 = vector.shape_cast %0 : vector<1x5x2x128xf32> to vector<5x2x128xf32>
    %c0_3 = arith.constant 0 : index
    %c0_4 = arith.constant 0 : index
    %c0_5 = arith.constant 0 : index
    %2 = vector.load %arg4[%c0_3, %c0_4, %c0_5] : memref<1x2x128xi8, #tpu.memory_space<vmem>>, vector<1x2x128xi8>
    %3 = vector.shape_cast %2 : vector<1x2x128xi8> to vector<2x128xi8>
    %4 = arith.extsi %3 : vector<2x128xi8> to vector<2x128xi32>
    %cst = arith.constant dense<0xFF800000> : vector<2x128xf32>
    %5 = vector.multi_reduction <maximumf>, %1, %cst [0] : vector<5x2x128xf32> to vector<2x128xf32>
    %6 = vector.shape_cast %5 : vector<2x128xf32> to vector<1x2x128xf32>
    %7 = vector.broadcast %6 : vector<1x2x128xf32> to vector<5x2x128xf32>
    %8 = arith.subf %1, %7 : vector<5x2x128xf32>
    %9 = math.exp %8 : vector<5x2x128xf32>
    %cst_6 = arith.constant dense<0.000000e+00> : vector<2x128xf32>
    %10 = vector.multi_reduction <add>, %9, %cst_6 [0] : vector<5x2x128xf32> to vector<2x128xf32>
    %11 = math.log %10 : vector<2x128xf32>
    %12 = arith.addf %11, %5 : vector<2x128xf32>
    %cst_7 = arith.constant 0.000000e+00 : f32
    %13 = vector.broadcast %cst_7 : f32 to vector<2x128xf32>
    %cst_8 = arith.constant 0.000000e+00 : f32
    %14 = vector.broadcast %cst_8 : f32 to vector<2x128xf32>
    %c0_i32 = arith.constant 0 : i32
    %15 = vector.broadcast %c0_i32 : i32 to vector<2x128xi32>
    %16 = arith.cmpi eq, %4, %15 : vector<2x128xi32>
    %17 = vector.extract_strided_slice %1 {offsets = [0, 0, 0], sizes = [1, 2, 128], strides = [1, 1, 1]} : vector<5x2x128xf32> to vector<1x2x128xf32>
    %18 = vector.shape_cast %17 : vector<1x2x128xf32> to vector<2x128xf32>
    %19 = arith.select %16, %18, %13 : vector<2x128xi1>, vector<2x128xf32>
    %c0_9 = arith.constant 0 : index
    %20 = memref.load %arg2[%c0_9] : memref<5xf32, #tpu.memory_space<smem>>
    %21 = vector.broadcast %20 : f32 to vector<2x128xf32>
    %22 = arith.select %16, %21, %14 : vector<2x128xi1>, vector<2x128xf32>
    %c1_i32 = arith.constant 1 : i32
    %23 = vector.broadcast %c1_i32 : i32 to vector<2x128xi32>
    %24 = arith.cmpi eq, %4, %23 : vector<2x128xi32>
    %25 = vector.extract_strided_slice %1 {offsets = [1, 0, 0], sizes = [1, 2, 128], strides = [1, 1, 1]} : vector<5x2x128xf32> to vector<1x2x128xf32>
    %26 = vector.shape_cast %25 : vector<1x2x128xf32> to vector<2x128xf32>
    %27 = arith.select %24, %26, %19 : vector<2x128xi1>, vector<2x128xf32>
    %c1 = arith.constant 1 : index
    %28 = memref.load %arg2[%c1] : memref<5xf32, #tpu.memory_space<smem>>
    %29 = vector.broadcast %28 : f32 to vector<2x128xf32>
    %30 = arith.select %24, %29, %22 : vector<2x128xi1>, vector<2x128xf32>
    %c2_i32 = arith.constant 2 : i32
    %31 = vector.broadcast %c2_i32 : i32 to vector<2x128xi32>
    %32 = arith.cmpi eq, %4, %31 : vector<2x128xi32>
    %33 = vector.extract_strided_slice %1 {offsets = [2, 0, 0], sizes = [1, 2, 128], strides = [1, 1, 1]} : vector<5x2x128xf32> to vector<1x2x128xf32>
    %34 = vector.shape_cast %33 : vector<1x2x128xf32> to vector<2x128xf32>
    %35 = arith.select %32, %34, %27 : vector<2x128xi1>, vector<2x128xf32>
    %c2 = arith.constant 2 : index
    %36 = memref.load %arg2[%c2] : memref<5xf32, #tpu.memory_space<smem>>
    %37 = vector.broadcast %36 : f32 to vector<2x128xf32>
    %38 = arith.select %32, %37, %30 : vector<2x128xi1>, vector<2x128xf32>
    %c3_i32 = arith.constant 3 : i32
    %39 = vector.broadcast %c3_i32 : i32 to vector<2x128xi32>
    %40 = arith.cmpi eq, %4, %39 : vector<2x128xi32>
    %41 = vector.extract_strided_slice %1 {offsets = [3, 0, 0], sizes = [1, 2, 128], strides = [1, 1, 1]} : vector<5x2x128xf32> to vector<1x2x128xf32>
    %42 = vector.shape_cast %41 : vector<1x2x128xf32> to vector<2x128xf32>
    %43 = arith.select %40, %42, %35 : vector<2x128xi1>, vector<2x128xf32>
    %c3 = arith.constant 3 : index
    %44 = memref.load %arg2[%c3] : memref<5xf32, #tpu.memory_space<smem>>
    %45 = vector.broadcast %44 : f32 to vector<2x128xf32>
    %46 = arith.select %40, %45, %38 : vector<2x128xi1>, vector<2x128xf32>
    %c4_i32 = arith.constant 4 : i32
    %47 = vector.broadcast %c4_i32 : i32 to vector<2x128xi32>
    %48 = arith.cmpi eq, %4, %47 : vector<2x128xi32>
    %49 = vector.extract_strided_slice %1 {offsets = [4, 0, 0], sizes = [1, 2, 128], strides = [1, 1, 1]} : vector<5x2x128xf32> to vector<1x2x128xf32>
    %50 = vector.shape_cast %49 : vector<1x2x128xf32> to vector<2x128xf32>
    %51 = arith.select %48, %50, %43 : vector<2x128xi1>, vector<2x128xf32>
    %c4 = arith.constant 4 : index
    %52 = memref.load %arg2[%c4] : memref<5xf32, #tpu.memory_space<smem>>
    %53 = vector.broadcast %52 : f32 to vector<2x128xf32>
    %54 = arith.select %48, %53, %46 : vector<2x128xi1>, vector<2x128xf32>
    %55 = arith.subf %12, %51 : vector<2x128xf32>
    %56 = arith.mulf %54, %55 : vector<2x128xf32>
    %57 = vector.shape_cast %56 : vector<2x128xf32> to vector<1x2x128xf32>
    %cst_10 = arith.constant dense<0.000000e+00> : vector<1xf32>
    %58 = vector.multi_reduction <add>, %57, %cst_10 [1, 2] : vector<1x2x128xf32> to vector<1xf32>
    %59 = vector.shape_cast %58 : vector<1xf32> to vector<1x1x1xf32>
    %60 = vector.extract %59[0, 0, 0] : f32 from vector<1x1x1xf32>
    %61 = vector.shape_cast %54 : vector<2x128xf32> to vector<1x2x128xf32>
    %cst_11 = arith.constant dense<0.000000e+00> : vector<1xf32>
    %62 = vector.multi_reduction <add>, %61, %cst_11 [1, 2] : vector<1x2x128xf32> to vector<1xf32>
    %63 = vector.shape_cast %62 : vector<1xf32> to vector<1x1x1xf32>
    %64 = vector.extract %63[0, 0, 0] : f32 from vector<1x1x1xf32>
    %65 = tpu.iota {dimensions = array<i32: 0>} : vector<2x128xi32>
    %66 = tpu.iota {dimensions = array<i32: 1>} : vector<2x128xi32>
    %c0_i32_12 = arith.constant 0 : i32
    %67 = vector.broadcast %c0_i32_12 : i32 to vector<2x128xi32>
    %68 = arith.cmpi eq, %65, %67 : vector<2x128xi32>
    %69 = vector.broadcast %60 : f32 to vector<2x128xf32>
    %70 = vector.broadcast %64 : f32 to vector<2x128xf32>
    %71 = arith.select %68, %69, %70 : vector<2x128xi1>, vector<2x128xf32>
    %c0_i32_13 = arith.constant 0 : i32
    %72 = vector.broadcast %c0_i32_13 : i32 to vector<2x128xi32>
    %73 = arith.cmpi eq, %66, %72 : vector<2x128xi32>
    %cst_14 = arith.constant 0.000000e+00 : f32
    %74 = vector.broadcast %cst_14 : f32 to vector<2x128xf32>
    %75 = arith.select %73, %71, %74 : vector<2x128xi1>, vector<2x128xf32>
    %c0_15 = arith.constant 0 : index
    %c0_16 = arith.constant 0 : index
    %76 = vector.load %arg5[%c0_15, %c0_16] : memref<2x128xf32, #tpu.memory_space<vmem>>, vector<2x128xf32>
    tpu.vector_store %arg5[%c0_15, %c0_16], %75 {strides = array<i32>} : memref<2x128xf32, #tpu.memory_space<vmem>>, vector<2x128xf32>,
    return
  }
  func.func @transform_0(%arg0: i32, %arg1: i32, %arg2: memref<5xf32, #tpu.memory_space<smem>>) -> (i32, i32, i32, i32) {
    %c0_i32 = arith.constant 0 : i32
    %c0_i32_0 = arith.constant 0 : i32
    %c0_i32_1 = arith.constant 0 : i32
    return %arg0, %c0_i32, %arg1, %c0_i32_0 : i32, i32, i32, i32
  }
  func.func @transform_1(%arg0: i32, %arg1: i32, %arg2: memref<5xf32, #tpu.memory_space<smem>>) -> (i32, i32, i32) {
    %c0_i32 = arith.constant 0 : i32
    %c0_i32_0 = arith.constant 0 : i32
    return %arg0, %arg1, %c0_i32 : i32, i32, i32
  }
  func.func @transform_2(%arg0: i32, %arg1: i32, %arg2: memref<5xf32, #tpu.memory_space<smem>>) -> (i32, i32) {
    %c1_i32 = arith.constant 1 : i32
    %0 = arith.muli %arg0, %c1_i32 : i32
    %1 = arith.addi %0, %arg1 : i32
    %c0_i32 = arith.constant 0 : i32
    %c0_i32_0 = arith.constant 0 : i32
    return %c0_i32, %1 : i32, i32
  }
}

</mosaic_0001>

<llo_original>
// kernel: tpu_custom_call.1
$region0: #{tpu_custom_call.1}
  #allocation0 [shape = 'u32[]', space=smem, size = 0x4, offset = 0x4, fixed_abs, tag = 'smem constant byte address 0x4 - core index']
  #allocation1 [shape = 'u32[144,128]{1,0:T(1,128)}', space=vmem, size = 0x12000, scoped, tag = 'internal scratch']
  #allocation2 [shape = 's32[1]{0}', space=sflag, size = 0x4, scoped, tag = 'scoped memory for tpu_custom_call.1']
  #allocation3 [shape = 'u8[512]{0}', space=smem, size = 0x200, scoped, tag = 'prefetched SMEM operand 0']
  %s0 = inlined_call_operand.hbm [shape: f32[5], index: 0, kind: input, shape index: {}]
  %s1 = inlined_call_operand.hbm [shape: f32[2,5,2,128], index: 1, kind: input, shape index: {}]
  %s2 = inlined_call_operand.vmem [shape: s8[2,2,128], index: 2, kind: input, shape index: {}]
  %s3 = inlined_call_operand.hbm [shape: f32[2,256], index: 3, kind: output, shape index: {}]
  %s4 = sld [smem:[#allocation0]]
  $region45: #{tpu_custom_call.1} parent=0
    _
  %s6 = ssub.s32 1, %s4
  %s7 = scalar_select 0, %s6, %s4
  %9 = dma.hbm_to_smem %s0, 16, [#allocation3], [#allocation2]
  %10 = dma.done [#allocation2], 16
  %11 = sfence
  $region1: #{tpu_custom_call.1} parent=0
    #allocation4 [shape = 'u8[10240]{0}', space=vmem, size = 0x2800, scoped, tag = 'input window, operand 1']
    #allocation5 [shape = 's32[2]{0}', space=sflag, size = 0x8, scoped, tag = 'scoped memory for tpu_custom_call.1']
    #allocation6 [shape = 's32[2]{0}', space=sflag, size = 0x8, scoped, tag = 'scoped memory for tpu_custom_call.1']
    #allocation7 [shape = 'u8[2048]{0}', space=vmem, size = 0x800, scoped, tag = 'output window, operand 0']
    %12 = vsyncpa [#allocation5], 0
    %s13 = scalar_lea.sflag [#allocation5], 1
    %14 = vsyncpa %s13, 0
    %15 = vsyncpa [#allocation6], 0
    %s16 = scalar_lea.sflag [#allocation6], 1
    %17 = vsyncpa %s16, 0
    loop: start=0, step=1, limit=4
    $region2: #{tpu_custom_call.1} parent=1 // loop_pre_header
      _
    $region3: #{tpu_custom_call.1} parent=1 // loop_header
      %s19 = sphi 0, %s23
      %p20 = scmp.ge.s32.totalorder %s19, 4
      %s26 = sphi 0, %s38
      %s27 = sphi 0, %s34
      %s28 = sphi 0, %s26
      %s29 = sphi 0, %s27
      %s30 = sphi 0, %s28
      %s31 = sphi 0, %s29
      %s43 = sphi 0, %s45
      %s46 = sphi 0, %s43
      %s47 = sphi 0, %s46
      %s63 = sphi 0, %s47
      %s71 = sphi 0, %s73
      %s74 = sphi 0, %s71
      %s75 = sphi 0, %s74
      %s91 = sphi 0, %s75
      %s99 = sphi 0, %s101
      %s102 = sphi 0, %s99
      %s103 = sphi 0, %s102
      %s119 = sphi 0, %s103
    $region4: #{tpu_custom_call.1} parent=1 // loop_header_branch
      %22 = sbr.rel (%p20) target = $region8
    $region5: #{tpu_custom_call.1} parent=1 // loop_body
      %s24 = ssub.s32 %s19, 1
      %s25 = ssub.s32 %s19, 2
      %s32 = sadd.s32 1, %s27
      %p33 = scmp.ge.s32.totalorder %s32, 1
      %s34 = scalar_select %p33, 0, %s32
      %s35 = sadd.s32 1, %s26
      %s36 = scalar_select %p33, %s35, %s26
      %p37 = scmp.ge.s32.totalorder %s36, 2
      %s38 = scalar_select %p37, 0, %s36
      %s39 = ssub.s32 %s26, %s38
      %s40 = ssub.s32 %s27, %s34
      %s41 = sor.u32 %s39, %s40
      %p42 = scmp.eq.s32.totalorder %s41, 0
      %s44 = sadd.s32 %s43, 1
      %s45 = scalar_select %p42, %s43, %s44
      %p48 = pneg %p42
      %p49 = scmp.eq.s32.totalorder %s19, 1
      %p50 = por %p48, %p49
      %p51 = scmp.ne.s32.totalorder %s43, %s46
      %p52 = scmp.eq.s32.totalorder %s19, 0
      %p53 = por %p51, %p52
      %p54 = scmp.ne.s32.totalorder %s43, %s46
      %p55 = scmp.eq.s32.totalorder %s24, 1
      %p56 = por %p54, %p55
      %p57 = scmp.ne.s32.totalorder %s46, %s47
      %p58 = scmp.eq.s32.totalorder %s24, 0
      %p59 = por %p57, %p58
      %p60 = scmp.ne.s32.totalorder %s46, %s47
      %p61 = scmp.eq.s32.totalorder %s25, 1
      %p62 = por %p60, %p61
      %p64 = scmp.ne.s32.totalorder %s47, %s63
      %p65 = scmp.eq.s32.totalorder %s25, 0
      %p66 = por %p64, %p65
      %s67 = ssub.s32 %s26, %s38
      %s68 = ssub.s32 %s27, %s34
      %s69 = sor.u32 %s67, %s68
      %p70 = scmp.eq.s32.totalorder %s69, 0
      %s72 = sadd.s32 %s71, 1
      %s73 = scalar_select %p70, %s71, %s72
      %p76 = pneg %p70
      %p77 = scmp.eq.s32.totalorder %s19, 1
      %p78 = por %p76, %p77
      %p79 = scmp.ne.s32.totalorder %s71, %s74
      %p80 = scmp.eq.s32.totalorder %s19, 0
      %p81 = por %p79, %p80
      %p82 = scmp.ne.s32.totalorder %s71, %s74
      %p83 = scmp.eq.s32.totalorder %s24, 1
      %p84 = por %p82, %p83
      %p85 = scmp.ne.s32.totalorder %s74, %s75
      %p86 = scmp.eq.s32.totalorder %s24, 0
      %p87 = por %p85, %p86
      %p88 = scmp.ne.s32.totalorder %s74, %s75
      %p89 = scmp.eq.s32.totalorder %s25, 1
      %p90 = por %p88, %p89
      %p92 = scmp.ne.s32.totalorder %s75, %s91
      %p93 = scmp.eq.s32.totalorder %s25, 0
      %p94 = por %p92, %p93
      %s95 = sadd.s32 %s26, %s27
      %s96 = sadd.s32 %s38, %s34
      %s97 = ssub.s32 %s95, %s96
      %p98 = scmp.eq.s32.totalorder %s97, 0
      %s100 = sadd.s32 %s99, 1
      %s101 = scalar_select %p98, %s99, %s100
      %p104 = pneg %p98
      %p105 = scmp.eq.s32.totalorder %s19, 1
      %p106 = por %p104, %p105
      %p107 = scmp.ne.s32.totalorder %s99, %s102
      %p108 = scmp.eq.s32.totalorder %s19, 0
      %p109 = por %p107, %p108
      %p110 = scmp.ne.s32.totalorder %s99, %s102
      %p111 = scmp.eq.s32.totalorder %s24, 1
      %p112 = por %p110, %p111
      %p113 = scmp.ne.s32.totalorder %s102, %s103
      %p114 = scmp.eq.s32.totalorder %s24, 0
      %p115 = por %p113, %p114
      %p116 = scmp.ne.s32.totalorder %s102, %s103
      %p117 = scmp.eq.s32.totalorder %s25, 1
      %p118 = por %p116, %p117
      %p120 = scmp.ne.s32.totalorder %s103, %s119
      %p121 = scmp.eq.s32.totalorder %s25, 0
      %p122 = por %p120, %p121
      %p123 = scmp.le.s32.totalorder 1, %s19
      %p124 = scmp.lt.s32.totalorder %s19, 3
      %p125 = pnand %p123, %p124
      %p126 = pneg %p125
      // Predicated region
      $region9: #{tpu_custom_call.1} parent=5 // pred_check
        _
      $region10: #{tpu_custom_call.1} parent=5 // pred_check_branch
        %128 = sbr.rel (%p125) target = $region12
      $region11: #{tpu_custom_call.1} parent=5 // pred_region
        %s129 = ssub.s32 %s19, 1
      $region12: #{tpu_custom_call.1} parent=5 // pred_fallthru
        _
      %p130 = scmp.lt.s32.totalorder %s19, 2
      // Predicated region
      $region13: #{tpu_custom_call.1} parent=5 // pred_check
        %p131 = pneg %p130
      $region14: #{tpu_custom_call.1} parent=5 // pred_check_branch
        %133 = sbr.rel (%p131) target = $region16
      $region15: #{tpu_custom_call.1} parent=5 // pred_region
        // Predicated region
        $region17: #{tpu_custom_call.1} parent=15 // pred_check
          %p134 = pneg %p53
        $region18: #{tpu_custom_call.1} parent=15 // pred_check_branch
          %136 = sbr.rel (%p134) target = $region20
        $region19: #{tpu_custom_call.1} parent=15 // pred_region
          %s137 = sand.u32 %s43, 1
          %s138 = scalar_lea.sflag [#allocation5], %s137
          %s139 = sand.u32 %s43, 1
          %s140 = smul.addr %s139, 10
          %s141 = scalar_lea.vmem [#allocation4], %s140
          %s143 = ssub.s32 160, 160
          %144 = vsyncadd %s138, %s143
          %s145 = smul.addr %s26, 5
          %s146 = sadd.s32 %s27, %s145
          %s147 = smul.addr %s146, 32
          %s148 = scalar_lea.hbm %s1, %s147
          %s149 = sshll.u32 %s141, 4
          %s150 = int_to_ptr.vmem [resolvable:$true] %s149
          %155 = dma.hbm_to_vmem [thread:$0]  %s148, 160, %s150, %s138, 32, 32, 2
        $region20: #{tpu_custom_call.1} parent=15 // pred_fallthru
          _
        // Predicated region
        $region21: #{tpu_custom_call.1} parent=15 // pred_check
          %p156 = pneg %p81
        $region22: #{tpu_custom_call.1} parent=15 // pred_check_branch
          %158 = sbr.rel (%p156) target = $region24
        $region23: #{tpu_custom_call.1} parent=15 // pred_region
          %p159 = scmp.lt.s32.totalorder %s26, 1
          %s160 = scalar_select %p159, %s26, 1
          %p161 = scmp.lt.s32.totalorder %s27, 0
          %s162 = scalar_select %p161, %s27, 0
          %s163 = sadd.s32 %s162, %s160
          %s164 = scalar_lea.vmem %s2, %s163
        $region24: #{tpu_custom_call.1} parent=15 // pred_fallthru
          _
      $region16: #{tpu_custom_call.1} parent=5 // pred_fallthru
        _
      %p165 = scmp.le.s32.totalorder 1, %s19
      %p166 = scmp.lt.s32.totalorder %s19, 3
      %p167 = pnand %p165, %p166
      %p168 = pneg %p167
      // Predicated region
      $region25: #{tpu_custom_call.1} parent=5 // pred_check
        _
      $region26: #{tpu_custom_call.1} parent=5 // pred_check_branch
        %170 = sbr.rel (%p167) target = $region28
      $region27: #{tpu_custom_call.1} parent=5 // pred_region
        %s171 = ssub.s32 %s19, 1
        %s172 = sand.u32 %s46, 1
        %s173 = scalar_lea.sflag [#allocation5], %s172
        %s174 = sand.u32 %s46, 1
        %s175 = smul.addr %s174, 10
        %s176 = scalar_lea.vmem [#allocation4], %s175
        // Predicated region
        $region29: #{tpu_custom_call.1} parent=27 // pred_check
          %p177 = pneg %p59
        $region30: #{tpu_custom_call.1} parent=27 // pred_check_branch
          %179 = sbr.rel (%p177) target = $region32
        $region31: #{tpu_custom_call.1} parent=27 // pred_region
          %180 = dma.done %s173, 160
        $region32: #{tpu_custom_call.1} parent=27 // pred_fallthru
          _
        %s181 = sand.u32 %s46, 1
        %s182 = scalar_lea.sflag [#allocation5], %s181
        %s183 = sand.u32 %s46, 1
        %s184 = smul.addr %s183, 10
        %s185 = scalar_lea.vmem [#allocation4], %s184
        %p186 = pneg %p59
        %p187 = pneg %p56
        %p188 = scmp.lt.s32.totalorder %s28, 1
        %s189 = scalar_select %p188, %s28, 1
        %p190 = scmp.lt.s32.totalorder %s29, 0
        %s191 = scalar_select %p190, %s29, 0
        %s192 = sadd.s32 %s191, %s189
        %s193 = scalar_lea.vmem %s2, %s192
        %p194 = pneg %p87
        %p195 = pneg %p84
        %p196 = pneg %p115
        %p197 = pneg %p112
        %s198 = sand.u32 %s102, 1
        %s199 = scalar_lea.sflag [#allocation6], %s198
        %s200 = sand.u32 %s102, 1
        %s201 = smul.addr %s200, 2
        %s202 = scalar_lea.vmem [#allocation7], %s201
        %p203 = scmp.lt.s32.totalorder %s28, 1
        %s204 = scalar_select %p203, %s28, 1
        %p205 = scmp.lt.s32.totalorder %s29, 0
        %s206 = scalar_select %p205, %s29, 0
        %s207 = sadd.s32 %s206, %s204
        %s208 = scalar_lea.vmem %s2, %s207
        %s209 = sadd.s32 %s28, %s29
        %v210 = vld [vmem:[%s176] sm:$0x3]
        %v211 = vld [vmem:[%s176 + $0x2] sm:$0x3]
        %v212 = vld [vmem:[%s176 + $0x4] sm:$0x3]
        %v213 = vld [vmem:[%s176 + $0x6] sm:$0x3]
        %v214 = vld [vmem:[%s176 + $0x8] sm:$0x3]
        %v215 = vld [vmem:[%s208] sm:$0x1]
        %v216 = vunpack.c.0.s8 %v215
        %vm217 = vcmask 1041408
        %v218 = vsel %vm217, %v210, -inf
        %v219 = vsel %vm217, %v211, -inf
        %v220 = vsel %vm217, %v212, -inf
        %v221 = vsel %vm217, %v213, -inf
        %v222 = vsel %vm217, %v214, -inf
        %v223 = vmax.f32 %v218, %v222
        %v224 = vmax.f32 %v223, %v219
        %v225 = vmax.f32 %v220, %v221
        %v226 = vmax.f32 %v224, %v225
        %v227 = vsub.f32 %v210, %v226
        %v228 = vsub.f32 %v211, %v226
        %v229 = vsub.f32 %v212, %v226
        %v230 = vsub.f32 %v213, %v226
        %v231 = vsub.f32 %v214, %v226
        %v232 = vmul.f32 %v227, 1.442695
        %v233 = vpow.pop %v232
        %v234 = vmul.f32 %v228, 1.442695
        %v235 = vpow.pop %v234
        %v236 = vmul.f32 %v229, 1.442695
        %v237 = vpow.pop %v236
        %v238 = vmul.f32 %v230, 1.442695
        %v239 = vpow.pop %v238
        %v240 = vmul.f32 %v231, 1.442695
        %v241 = vpow.pop %v240
        %v242 = vsel %vm217, %v233, 0.0
        %v243 = vsel %vm217, %v235, 0.0
        %v244 = vadd.f32 %v242, %v243
        %v245 = vsel %vm217, %v237, 0.0
        %v246 = vadd.f32 %v244, %v245
        %v247 = vsel %vm217, %v239, 0.0
        %v248 = vadd.f32 %v246, %v247
        %v249 = vsel %vm217, %v241, 0.0
        %v250 = vadd.f32 %v248, %v249
        %v251 = vlog2.pop %v250
        %v252 = vmul.f32 %v251, 0.6931472
        %v253 = vadd.f32 %v252, %v226
        %vm254 = vcmp.eq.s32.totalorder %v216, 0
        %v255 = vsel %vm254, %v210, 0.0
        %s256 = sld [smem:[#allocation3]]
        %v257 = vstv %s256
        %v258 = vsel %vm254, %v257, 0.0
        %vm259 = vcmp.eq.s32.totalorder %v216, 1
        %v260 = vsel %vm259, %v211, %v255
        %s261 = sld [smem:[#allocation3 + $0x1]]
        %v262 = vstv %s261
        %v263 = vsel %vm259, %v262, %v258
        %vm264 = vcmp.eq.s32.totalorder %v216, 2
        %v265 = vsel %vm264, %v212, %v260
        %s266 = sld [smem:[#allocation3 + $0x2]]
        %v267 = vstv %s266
        %v268 = vsel %vm264, %v267, %v263
        %vm269 = vcmp.eq.s32.totalorder %v216, 3
        %v270 = vsel %vm269, %v213, %v265
        %s271 = sld [smem:[#allocation3 + $0x3]]
        %v272 = vstv %s271
        %v273 = vsel %vm269, %v272, %v268
        %vm274 = vcmp.eq.s32.totalorder %v216, 4
        %v275 = vsel %vm274, %v214, %v270
        %s276 = sld [smem:[#allocation3 + $0x4]]
        %v277 = vstv %s276
        %v278 = vsel %vm274, %v277, %v273
        %v279 = vsub.f32 %v253, %v275
        %v280 = vmul.f32 %v278, %v279
        %v281 = vsel %vm217, %v280, 0.0
        %282 = vadd.xlane.f32.xlu0 %v281
        %v283 = vpop.xlane.xlu0 %282
        %v284 = vrot.slane %v283, 4
        %v285 = vadd.f32 %v283, %v284
        %v286 = vrot.slane %v285, 2
        %v287 = vadd.f32 %v285, %v286
        %v288 = vrot.slane %v287, 1
        %v289 = vadd.f32 %v287, %v288
        %s290 = vtos %v289
        %v291 = vsel %vm217, %v278, 0.0
        %292 = vadd.xlane.f32.xlu0 %v291
        %v293 = vpop.xlane.xlu0 %292
        %v294 = vrot.slane %v293, 4
        %v295 = vadd.f32 %v293, %v294
        %v296 = vrot.slane %v295, 2
        %v297 = vadd.f32 %v295, %v296
        %v298 = vrot.slane %v297, 1
        %v299 = vadd.f32 %v297, %v298
        %s300 = vtos %v299
        %v301 = vlaneseq
        %v302 = vshrl.u32 %v301, 7
        %v303 = vlaneseq
        %v304 = vand.u32 %v303, 127
        %vm305 = vcmp.eq.s32.totalorder %v302, 0
        %v306 = vstv %s290
        %v307 = vstv %s300
        %v308 = vsel %vm305, %v306, %v307
        %vm309 = vcmp.eq.s32.totalorder %v304, 0
        %v310 = vsel %vm309, %v308, 0.0
        %311 = vst [vmem:[%s202] sm:$0x3] %v310
        %s312 = sand.u32 %s102, 1
        %s313 = scalar_lea.sflag [#allocation6], %s312
        %s314 = sand.u32 %s102, 1
        %s315 = smul.addr %s314, 2
        %s316 = scalar_lea.vmem [#allocation7], %s315
        // Predicated region
        $region33: #{tpu_custom_call.1} parent=27 // pred_check
          %p317 = pneg %p112
        $region34: #{tpu_custom_call.1} parent=27 // pred_check_branch
          %319 = sbr.rel (%p317) target = $region36
        $region35: #{tpu_custom_call.1} parent=27 // pred_region
          %s320 = sadd.s32 %s28, %s29
          %s322 = ssub.s32 32, 32
          %323 = vsyncadd %s313, %s322
          %s324 = smul.addr %s320, 32
          %s325 = scalar_lea.hbm %s3, %s324
          %s327 = sshll.u32 %s316, 4
          %s328 = int_to_ptr.vmem [resolvable:$true] %s327
          %330 = dma.vmem_to_hbm [thread:$0]  %s328, 32, %s325, %s313
        $region36: #{tpu_custom_call.1} parent=27 // pred_fallthru
          _
      $region28: #{tpu_custom_call.1} parent=5 // pred_fallthru
        _
      %p331 = scmp.le.s32.totalorder 2, %s19
      // Predicated region
      $region37: #{tpu_custom_call.1} parent=5 // pred_check
        %p332 = pneg %p331
      $region38: #{tpu_custom_call.1} parent=5 // pred_check_branch
        %334 = sbr.rel (%p332) target = $region40
      $region39: #{tpu_custom_call.1} parent=5 // pred_region
        %s335 = ssub.s32 %s19, 2
        // Predicated region
        $region41: #{tpu_custom_call.1} parent=39 // pred_check
          %p336 = pneg %p118
        $region42: #{tpu_custom_call.1} parent=39 // pred_check_branch
          %338 = sbr.rel (%p336) target = $region44
        $region43: #{tpu_custom_call.1} parent=39 // pred_region
          %s339 = sand.u32 %s103, 1
          %s340 = scalar_lea.sflag [#allocation6], %s339
          %s341 = sand.u32 %s103, 1
          %s342 = smul.addr %s341, 2
          %s343 = scalar_lea.vmem [#allocation7], %s342
          %344 = dma.done %s340, 32
        $region44: #{tpu_custom_call.1} parent=39 // pred_fallthru
          _
      $region40: #{tpu_custom_call.1} parent=5 // pred_fallthru
        _
    $region6: #{tpu_custom_call.1} parent=1 // loop_footer
      %s23 = sadd.s32 1, %s19
    $region7: #{tpu_custom_call.1} parent=1 // loop_footer_branch
      %18 = sbr.rel target = $region3
    $region8: #{tpu_custom_call.1} parent=1 // loop_exit
      _
    %345 = vsyncpa [#allocation5], 1
    %s346 = scalar_lea.sflag [#allocation5], 1
    %347 = vsyncpa %s346, 1
    %348 = vsyncpa [#allocation6], 1
    %s349 = scalar_lea.sflag [#allocation6], 1
    %350 = vsyncpa %s349, 1

</llo_original>
